<compile_context>
chip_gen: v5e
topology: v5e:2x2
jax: 0.10.0
libtpu: 0.0.40
codegen_flags: <defaults>
</compile_context>

<pallas_src>
import jax
import jax.numpy as jnp
from jax.experimental import pallas as pl
from jax.experimental.pallas import tpu as pltpu

BN_EPS = 1e-5    # torch.nn.BatchNorm1d default
LANE = 128


def _relavant_learner_kernel(adj_ref, dr_ref, dc_ref, x_ref, w1_ref,
                             g_ref, beta_ref, w2_ref, b2_ref, o_ref):
    f32 = jnp.float32
    n = adj_ref.shape[0]

    # ---- build A_hat = D^{-1/2} (A + I) D^{-1/2} in VMEM, keep it as one bf16 tile ----
    rows = jax.lax.broadcasted_iota(jnp.int32, (n, n), 0)
    cols = jax.lax.broadcasted_iota(jnp.int32, (n, n), 1)
    a = adj_ref[...].astype(f32) + (rows == cols).astype(f32)          # A + I
    a_hat = (a * dr_ref[...] * dc_ref[...]).astype(jnp.bfloat16)       # reused by both layers

    # ---- GCNConv 1:  A_hat @ (X @ W1)     (b1 omitted: cancelled exactly by BN mean) ----
    xw = jnp.dot(x_ref[...], w1_ref[...], preferred_element_type=f32)
    h = jnp.dot(a_hat, xw.astype(jnp.bfloat16), preferred_element_type=f32)

    # ---- BatchNorm1d over nodes (training-mode batch stats), single fused pass ----
    inv_n = 1.0 / n
    mu = jnp.sum(h, axis=0, keepdims=True) * inv_n
    ms = jnp.sum(h * h, axis=0, keepdims=True) * inv_n
    var = ms - mu * mu
    scale = g_ref[...] * jax.lax.rsqrt(var + BN_EPS)
    shift = beta_ref[...] - mu * scale
    h = jnp.maximum(h * scale + shift, 0.0)        # BN + ReLU (dropout p=0.0 is a no-op)

    # ---- GCNConv 2:  A_hat @ (H @ W2) + b2 ----
    hw = jnp.dot(h.astype(jnp.bfloat16), w2_ref[...], preferred_element_type=f32)
    y = jnp.dot(a_hat, hw.astype(jnp.bfloat16), preferred_element_type=f32) + b2_ref[...]

    # ---- Tanh (self.act) ----
    o_ref[...] = jnp.tanh(y)


def _round_up(x, m):
    return ((x + m - 1) // m) * m


def _pad_to(a, shape):
    pads = [(0, t - s) for s, t in zip(a.shape, shape)]
    if all(p == (0, 0) for p in pads):
        return a
    return jnp.pad(a, pads)


def relavant_learner_forward(x, adj, params):
    """x: [N, in_dim] f32, adj: [N, N] f32 (dense, unnormalized, no self loops)."""
    n, in_dim = x.shape
    w1, gamma, beta, w2, b2 = (params[k] for k in ("w1", "gamma", "beta", "w2", "b2"))
    h_dim, out_dim = w2.shape
    in_p, h_p, out_p = (_round_up(d, LANE) for d in (in_dim, h_dim, out_dim))

    # Degree of (A + I) for symmetric GCN normalization; the row/col scaling itself is
    # applied inside the kernel so A_hat is never written back to HBM.
    deg = jnp.sum(adj, axis=1) + 1.0
    d_inv_sqrt = jax.lax.rsqrt(jnp.maximum(deg, 1e-12)).astype(jnp.float32)
    dr = d_inv_sqrt.reshape(n, 1)
    dc = d_inv_sqrt.reshape(1, n)

    # bf16 at the boundary (halves the dominant N x N DMA + VMEM buffer), lane-dense
    # (128-padded) feature dims; the zero padding is mathematically inert and sliced off.
    adj_bf = adj.astype(jnp.bfloat16)
    x_p = _pad_to(x, (n, in_p)).astype(jnp.bfloat16)
    w1_p = _pad_to(w1, (in_p, h_p)).astype(jnp.bfloat16)
    g_p = _pad_to(gamma, (1, h_p)).astype(jnp.float32)
    beta_p = _pad_to(beta, (1, h_p)).astype(jnp.float32)
    w2_p = _pad_to(w2, (h_p, out_p)).astype(jnp.bfloat16)
    b2_p = _pad_to(b2, (1, out_p)).astype(jnp.float32)

    cost = pl.CostEstimate(
        flops=int(2 * n * (in_p * h_p + n * h_p + h_p * out_p + n * out_p)),
        transcendentals=int(n * out_p + h_p),
        bytes_accessed=int(
            n * n * 2 + 2 * n * 4 + n * in_p * 2 + in_p * h_p * 2
            + 2 * h_p * 4 + h_p * out_p * 2 + out_p * 4 + n * out_p * 4),
    )

    full = lambda shape: pl.BlockSpec(shape, lambda: tuple(0 for _ in shape))
    operands = (adj_bf, dr, dc, x_p, w1_p, g_p, beta_p, w2_p, b2_p)

    out = pl.pallas_call(
        _relavant_learner_kernel,
        out_shape=jax.ShapeDtypeStruct((n, out_p), jnp.float32),
        grid=(),
        in_specs=[full(op.shape) for op in operands],
        out_specs=full((n, out_p)),
        compiler_params=pltpu.CompilerParams(vmem_limit_bytes=48 << 20),
        cost_estimate=cost,
    )(*operands)

    return out[:, :out_dim]


def init_params(key, in_dim, h_dim, out_dim):
    k1, k2 = jax.random.split(key)

    def glorot(k, fan_in, fan_out):
        lim = (6.0 / (fan_in + fan_out)) ** 0.5
        return jax.random.uniform(k, (fan_in, fan_out), jnp.float32, -lim, lim)

    return {
        "w1": glorot(k1, in_dim, h_dim),
        "b1": jnp.zeros((1, h_dim), jnp.float32),   # not fed to the kernel: cancelled by BN
        "gamma": jnp.ones((1, h_dim), jnp.float32),
        "beta": jnp.zeros((1, h_dim), jnp.float32),
        "w2": glorot(k2, h_dim, out_dim),
        "b2": jnp.zeros((1, out_dim), jnp.float32),
    }


def _reference_forward(x, adj, params):
    """Pure-JAX f32 reference matching the PyTorch module semantics."""
    n = x.shape[0]
    a = adj + jnp.eye(n, dtype=adj.dtype)
    deg = jnp.sum(a, axis=1)
    dis = jax.lax.rsqrt(jnp.maximum(deg, 1e-12))
    a_hat = a * dis[:, None] * dis[None, :]
    h = a_hat @ (x @ params["w1"]) + params["b1"]
    mu = jnp.mean(h, axis=0, keepdims=True)
    var = jnp.mean((h - mu) ** 2, axis=0, keepdims=True)
    h = (h - mu) * jax.lax.rsqrt(var + BN_EPS) * params["gamma"] + params["beta"]
    h = jnp.maximum(h, 0.0)
    y = a_hat @ (h @ params["w2"]) + params["b2"]
    return jnp.tanh(y)


if __name__ == "__main__":
    N, IN_DIM, H_DIM, OUT_DIM = 16, 32, 32, 16

    key = jax.random.PRNGKey(0)
    kx, ka, kp = jax.random.split(key, 3)

    x = jax.random.normal(kx, (N, IN_DIM), jnp.float32)
    # deterministic random undirected adjacency (0/1), no self loops
    a_rand = jax.random.uniform(ka, (N, N))
    adj = (a_rand < 0.3).astype(jnp.float32)
    adj = jnp.maximum(adj, adj.T) * (1.0 - jnp.eye(N, dtype=jnp.float32))

    params = init_params(kp, IN_DIM, H_DIM, OUT_DIM)

    out = relavant_learner_forward(x, adj, params)
    jax.block_until_ready(out)

    assert out.shape == (N, OUT_DIM)
    assert bool(jnp.all(jnp.isfinite(out)))

    # f32 reference check (relaxed tolerance: bf16 MXU feeds, f32 accumulation)
    ref = _reference_forward(x, adj, params)
    max_err = float(jnp.max(jnp.abs(out - ref)))
    assert max_err < 1e-1, f"max abs err vs f32 reference = {max_err}"

    print("KERNEL_OK")
</pallas_src>

<mosaic_0001>
module attributes {stable_mosaic.version = 11 : i64} {
  func.func @_relavant_learner_kernel(%arg0: memref<16x16xbf16, #tpu.memory_space<vmem>>, %arg1: memref<16x1xf32, #tpu.memory_space<vmem>>, %arg2: memref<1x16xf32, #tpu.memory_space<vmem>>, %arg3: memref<16x128xbf16, #tpu.memory_space<vmem>>, %arg4: memref<128x128xbf16, #tpu.memory_space<vmem>>, %arg5: memref<1x128xf32, #tpu.memory_space<vmem>>, %arg6: memref<1x128xf32, #tpu.memory_space<vmem>>, %arg7: memref<128x128xbf16, #tpu.memory_space<vmem>>, %arg8: memref<1x128xf32, #tpu.memory_space<vmem>>, %arg9: memref<16x128xf32, #tpu.memory_space<vmem>>) attributes {dimension_semantics = [], scalar_prefetch = 0 : i64, scratch_operands = 0 : i64, tpu.core_type = #tpu.core_type<tc>} {
    %0 = tpu.iota {dimensions = array<i32: 0>} : vector<16x16xi32>
    %1 = tpu.iota {dimensions = array<i32: 1>} : vector<16x16xi32>
    %c0 = arith.constant 0 : index
    %c0_0 = arith.constant 0 : index
    %2 = vector.load %arg0[%c0, %c0_0] : memref<16x16xbf16, #tpu.memory_space<vmem>>, vector<16x16xbf16>
    %3 = arith.extf %2 : vector<16x16xbf16> to vector<16x16xf32>
    %4 = arith.cmpi eq, %0, %1 : vector<16x16xi32>
    %5 = arith.extui %4 : vector<16x16xi1> to vector<16x16xi32>
    %6 = arith.sitofp %5 : vector<16x16xi32> to vector<16x16xf32>
    %7 = arith.addf %3, %6 : vector<16x16xf32>
    %c0_1 = arith.constant 0 : index
    %c0_2 = arith.constant 0 : index
    %8 = vector.load %arg1[%c0_1, %c0_2] : memref<16x1xf32, #tpu.memory_space<vmem>>, vector<16x1xf32>
    %9 = vector.broadcast %8 : vector<16x1xf32> to vector<16x16xf32>
    %10 = arith.mulf %7, %9 : vector<16x16xf32>
    %c0_3 = arith.constant 0 : index
    %c0_4 = arith.constant 0 : index
    %11 = vector.load %arg2[%c0_3, %c0_4] : memref<1x16xf32, #tpu.memory_space<vmem>>, vector<1x16xf32>
    %12 = vector.broadcast %11 : vector<1x16xf32> to vector<16x16xf32>
    %13 = arith.mulf %10, %12 : vector<16x16xf32>
    %14 = arith.truncf %13 : vector<16x16xf32> to vector<16x16xbf16>
    %c0_5 = arith.constant 0 : index
    %c0_6 = arith.constant 0 : index
    %15 = vector.load %arg3[%c0_5, %c0_6] : memref<16x128xbf16, #tpu.memory_space<vmem>>, vector<16x128xbf16>
    %c0_7 = arith.constant 0 : index
    %c0_8 = arith.constant 0 : index
    %16 = vector.load %arg4[%c0_7, %c0_8] : memref<128x128xbf16, #tpu.memory_space<vmem>>, vector<128x128xbf16>
    %cst = arith.constant dense<0.000000e+00> : vector<16x128xf32>
    %17 = tpu.matmul %15, %16, %cst {dimension_numbers = #tpu.dot_dimension_numbers<[1], [0], [0], [1], [0, 0, 1, 1], [], []>} : vector<16x128xbf16>, vector<128x128xbf16>, vector<16x128xf32> -> vector<16x128xf32>
    %18 = arith.truncf %17 : vector<16x128xf32> to vector<16x128xbf16>
    %cst_9 = arith.constant dense<0.000000e+00> : vector<16x128xf32>
    %19 = tpu.matmul %14, %18, %cst_9 {dimension_numbers = #tpu.dot_dimension_numbers<[1], [0], [0], [1], [0, 0, 1, 1], [], []>} : vector<16x16xbf16>, vector<16x128xbf16>, vector<16x128xf32> -> vector<16x128xf32>
    %cst_10 = arith.constant dense<0.000000e+00> : vector<128xf32>
    %20 = vector.multi_reduction <add>, %19, %cst_10 [0] : vector<16x128xf32> to vector<128xf32>
    %21 = vector.shape_cast %20 : vector<128xf32> to vector<1x128xf32>
    %cst_11 = arith.constant 6.250000e-02 : f32
    %22 = vector.broadcast %cst_11 : f32 to vector<1x128xf32>
    %23 = arith.mulf %21, %22 : vector<1x128xf32>
    %24 = arith.mulf %19, %19 : vector<16x128xf32>
    %cst_12 = arith.constant dense<0.000000e+00> : vector<128xf32>
    %25 = vector.multi_reduction <add>, %24, %cst_12 [0] : vector<16x128xf32> to vector<128xf32>
    %26 = vector.shape_cast %25 : vector<128xf32> to vector<1x128xf32>
    %cst_13 = arith.constant 6.250000e-02 : f32
    %27 = vector.broadcast %cst_13 : f32 to vector<1x128xf32>
    %28 = arith.mulf %26, %27 : vector<1x128xf32>
    %29 = arith.mulf %23, %23 : vector<1x128xf32>
    %30 = arith.subf %28, %29 : vector<1x128xf32>
    %c0_14 = arith.constant 0 : index
    %c0_15 = arith.constant 0 : index
    %31 = vector.load %arg5[%c0_14, %c0_15] : memref<1x128xf32, #tpu.memory_space<vmem>>, vector<1x128xf32>
    %cst_16 = arith.constant 9.99999974E-6 : f32
    %32 = vector.broadcast %cst_16 : f32 to vector<1x128xf32>
    %33 = arith.addf %30, %32 : vector<1x128xf32>
    %34 = math.rsqrt %33 : vector<1x128xf32>
    %35 = arith.mulf %31, %34 : vector<1x128xf32>
    %c0_17 = arith.constant 0 : index
    %c0_18 = arith.constant 0 : index
    %36 = vector.load %arg6[%c0_17, %c0_18] : memref<1x128xf32, #tpu.memory_space<vmem>>, vector<1x128xf32>
    %37 = arith.mulf %23, %35 : vector<1x128xf32>
    %38 = arith.subf %36, %37 : vector<1x128xf32>
    %39 = vector.broadcast %35 : vector<1x128xf32> to vector<16x128xf32>
    %40 = arith.mulf %19, %39 : vector<16x128xf32>
    %41 = vector.broadcast %38 : vector<1x128xf32> to vector<16x128xf32>
    %42 = arith.addf %40, %41 : vector<16x128xf32>
    %cst_19 = arith.constant 0.000000e+00 : f32
    %43 = vector.broadcast %cst_19 : f32 to vector<16x128xf32>
    %44 = arith.maximumf %42, %43 : vector<16x128xf32>
    %45 = arith.truncf %44 : vector<16x128xf32> to vector<16x128xbf16>
    %c0_20 = arith.constant 0 : index
    %c0_21 = arith.constant 0 : index
    %46 = vector.load %arg7[%c0_20, %c0_21] : memref<128x128xbf16, #tpu.memory_space<vmem>>, vector<128x128xbf16>
    %cst_22 = arith.constant dense<0.000000e+00> : vector<16x128xf32>
    %47 = tpu.matmul %45, %46, %cst_22 {dimension_numbers = #tpu.dot_dimension_numbers<[1], [0], [0], [1], [0, 0, 1, 1], [], []>} : vector<16x128xbf16>, vector<128x128xbf16>, vector<16x128xf32> -> vector<16x128xf32>
    %48 = arith.truncf %47 : vector<16x128xf32> to vector<16x128xbf16>
    %cst_23 = arith.constant dense<0.000000e+00> : vector<16x128xf32>
    %49 = tpu.matmul %14, %48, %cst_23 {dimension_numbers = #tpu.dot_dimension_numbers<[1], [0], [0], [1], [0, 0, 1, 1], [], []>} : vector<16x16xbf16>, vector<16x128xbf16>, vector<16x128xf32> -> vector<16x128xf32>
    %c0_24 = arith.constant 0 : index
    %c0_25 = arith.constant 0 : index
    %50 = vector.load %arg8[%c0_24, %c0_25] : memref<1x128xf32, #tpu.memory_space<vmem>>, vector<1x128xf32>
    %51 = vector.broadcast %50 : vector<1x128xf32> to vector<16x128xf32>
    %52 = arith.addf %49, %51 : vector<16x128xf32>
    %53 = math.tanh %52 : vector<16x128xf32>
    %c0_26 = arith.constant 0 : index
    %c0_27 = arith.constant 0 : index
    %54 = vector.load %arg9[%c0_26, %c0_27] : memref<16x128xf32, #tpu.memory_space<vmem>>, vector<16x128xf32>
    tpu.vector_store %arg9[%c0_26, %c0_27], %53 {strides = array<i32>} : memref<16x128xf32, #tpu.memory_space<vmem>>, vector<16x128xf32>,
    return
  }
}

</mosaic_0001>

<llo_original>
// kernel: tpu_custom_call.1
$region0: #{tpu_custom_call.1}
  #allocation0 [shape = 'u32[]', space=smem, size = 0x4, offset = 0x4, fixed_abs, tag = 'smem constant byte address 0x4 - core index']
  #allocation1 [shape = 'u32[72,128]{1,0:T(1,128)}', space=vmem, size = 0x9000, scoped, tag = 'internal scratch']
  %s0 = inlined_call_operand.vmem [shape: bf16[16,16], index: 0, kind: input, shape index: {}]
  %s1 = inlined_call_operand.vmem [shape: f32[16,1], index: 1, kind: input, shape index: {}]
  %s2 = inlined_call_operand.vmem [shape: f32[1,16], index: 2, kind: input, shape index: {}]
  %s3 = inlined_call_operand.vmem [shape: bf16[16,128], index: 3, kind: input, shape index: {}]
  %s4 = inlined_call_operand.hbm [shape: bf16[128,128], index: 4, kind: input, shape index: {}]
  %s5 = inlined_call_operand.vmem [shape: f32[1,128], index: 5, kind: input, shape index: {}]
  %s6 = inlined_call_operand.vmem [shape: f32[1,128], index: 6, kind: input, shape index: {}]
  %s7 = inlined_call_operand.hbm [shape: bf16[128,128], index: 7, kind: input, shape index: {}]
  %s8 = inlined_call_operand.vmem [shape: f32[1,128], index: 8, kind: input, shape index: {}]
  %s9 = inlined_call_operand.hbm [shape: f32[16,128], index: 9, kind: output, shape index: {}]
  %s10 = sld [smem:[#allocation0]]
  $region54: #{tpu_custom_call.1} parent=0
    _
  %s12 = ssub.s32 1, %s10
  %s13 = scalar_select 0, %s12, %s10
  $region1: #{tpu_custom_call.1} parent=0
    #allocation2 [shape = 'u8[32768]{0}', space=vmem, size = 0x8000, scoped, tag = 'input window, operand 4, single buffered']
    #allocation3 [shape = 's32[1]{0}', space=sflag, size = 0x4, scoped, tag = 'scoped memory for tpu_custom_call.1']
    #allocation4 [shape = 's32[1]{0}', space=sflag, size = 0x4, scoped, tag = 'scoped memory for tpu_custom_call.1']
    #allocation5 [shape = 'u8[32768]{0}', space=vmem, size = 0x8000, scoped, tag = 'input window, operand 7, single buffered']
    #allocation6 [shape = 's32[1]{0}', space=sflag, size = 0x4, scoped, tag = 'scoped memory for tpu_custom_call.1']
    #allocation7 [shape = 'u8[8192]{0}', space=vmem, size = 0x2000, scoped, tag = 'output window, operand 0, single buffered']
    %14 = vsyncpa [#allocation3], 0
    %15 = vsyncpa [#allocation6], 0
    %16 = vsyncpa [#allocation4], 0
    // Predicated region
    $region2: #{tpu_custom_call.1} parent=1 // pred_check
      _
    $region3: #{tpu_custom_call.1} parent=1 // pred_check_branch
      %18 = sbr.rel (0) target = $region5
    $region4: #{tpu_custom_call.1} parent=1 // pred_region
      _
    $region5: #{tpu_custom_call.1} parent=1 // pred_fallthru
      _
    // Predicated region
    $region6: #{tpu_custom_call.1} parent=1 // pred_check
      _
    $region7: #{tpu_custom_call.1} parent=1 // pred_check_branch
      %20 = sbr.rel (0) target = $region9
    $region8: #{tpu_custom_call.1} parent=1 // pred_region
      _
    $region9: #{tpu_custom_call.1} parent=1 // pred_fallthru
      _
    // Predicated region
    $region10: #{tpu_custom_call.1} parent=1 // pred_check
      _
    $region11: #{tpu_custom_call.1} parent=1 // pred_check_branch
      %22 = sbr.rel (0) target = $region13
    $region12: #{tpu_custom_call.1} parent=1 // pred_region
      _
    $region13: #{tpu_custom_call.1} parent=1 // pred_fallthru
      _
    // Predicated region
    $region14: #{tpu_custom_call.1} parent=1 // pred_check
      _
    $region15: #{tpu_custom_call.1} parent=1 // pred_check_branch
      %24 = sbr.rel (0) target = $region17
    $region16: #{tpu_custom_call.1} parent=1 // pred_region
      _
    $region17: #{tpu_custom_call.1} parent=1 // pred_fallthru
      _
    // Predicated region
    $region18: #{tpu_custom_call.1} parent=1 // pred_check
      _
    $region19: #{tpu_custom_call.1} parent=1 // pred_check_branch
      %26 = sbr.rel (0) target = $region21
    $region20: #{tpu_custom_call.1} parent=1 // pred_region
      %28 = vsyncadd [#allocation3], 0
      %s29 = sshll.u32 %s4, 4
      %s30 = int_to_ptr.hbm [resolvable:$true] %s29
      %s31 = sshll.u32 [#allocation2], 4
      %s32 = int_to_ptr.vmem [resolvable:$true] %s31
      %37 = dma.hbm_to_vmem [thread:$0]  %s30, 1024, %s32, [#allocation3], 64, 64, 4
    $region21: #{tpu_custom_call.1} parent=1 // pred_fallthru
      _
    // Predicated region
    $region22: #{tpu_custom_call.1} parent=1 // pred_check
      _
    $region23: #{tpu_custom_call.1} parent=1 // pred_check_branch
      %39 = sbr.rel (0) target = $region25
    $region24: #{tpu_custom_call.1} parent=1 // pred_region
      _
    $region25: #{tpu_custom_call.1} parent=1 // pred_fallthru
      _
    // Predicated region
    $region26: #{tpu_custom_call.1} parent=1 // pred_check
      _
    $region27: #{tpu_custom_call.1} parent=1 // pred_check_branch
      %41 = sbr.rel (0) target = $region29
    $region28: #{tpu_custom_call.1} parent=1 // pred_region
      _
    $region29: #{tpu_custom_call.1} parent=1 // pred_fallthru
      _
    // Predicated region
    $region30: #{tpu_custom_call.1} parent=1 // pred_check
      _
    $region31: #{tpu_custom_call.1} parent=1 // pred_check_branch
      %43 = sbr.rel (0) target = $region33
    $region32: #{tpu_custom_call.1} parent=1 // pred_region
      %45 = vsyncadd [#allocation6], 0
      %s46 = sshll.u32 %s7, 4
      %s47 = int_to_ptr.hbm [resolvable:$true] %s46
      %s48 = sshll.u32 [#allocation5], 4
      %s49 = int_to_ptr.vmem [resolvable:$true] %s48
      %54 = dma.hbm_to_vmem [thread:$0]  %s47, 1024, %s49, [#allocation6], 64, 64, 4
    $region33: #{tpu_custom_call.1} parent=1 // pred_fallthru
      _
    // Predicated region
    $region34: #{tpu_custom_call.1} parent=1 // pred_check
      _
    $region35: #{tpu_custom_call.1} parent=1 // pred_check_branch
      %56 = sbr.rel (0) target = $region37
    $region36: #{tpu_custom_call.1} parent=1 // pred_region
      _
    $region37: #{tpu_custom_call.1} parent=1 // pred_fallthru
      _
    // Predicated region
    $region38: #{tpu_custom_call.1} parent=1 // pred_check
      _
    $region39: #{tpu_custom_call.1} parent=1 // pred_check_branch
      %58 = sbr.rel (0) target = $region41
    $region40: #{tpu_custom_call.1} parent=1 // pred_region
      %60 = dma.done [#allocation3], 1024
    $region41: #{tpu_custom_call.1} parent=1 // pred_fallthru
      _
    // Predicated region
    $region42: #{tpu_custom_call.1} parent=1 // pred_check
      _
    $region43: #{tpu_custom_call.1} parent=1 // pred_check_branch
      %62 = sbr.rel (0) target = $region45
    $region44: #{tpu_custom_call.1} parent=1 // pred_region
      %64 = dma.done [#allocation6], 1024
    $region45: #{tpu_custom_call.1} parent=1 // pred_fallthru
      _
    %v66 = vlaneseq
    %v67 = vshrl.u32 %v66, 7
    %v68 = vadd.s32 %v67, 8
    %v69 = vlaneseq
    %v70 = vand.u32 %v69, 127
    %v71 = vld [vmem:[%s0] sm:$0xf]
    %v72 = vld [vmem:[%s0 + $0x4] sm:$0xf]
    %v73 = vunpack.c.l.bf16 %v71
    %v74 = vunpack.c.l.bf16 %v72
    %vm75 = vcmp.eq.s32.totalorder %v67, %v70
    %vm76 = vcmp.eq.s32.totalorder %v68, %v70
    %v77 = vsel %vm75, 1, 0
    %v78 = vsel %vm76, 1, 0
    %v79 = vcvt.s32.f32 %v77
    %v80 = vcvt.s32.f32 %v78
    %v81 = vadd.f32 %v73, %v79
    %v82 = vadd.f32 %v74, %v80
    %v83 = vld [vmem:[%s1] sm:$0xff]
    %v84 = vld [vmem:[%s1 + $0x8] sm:$0xff]
    %86 = vset.pattern.permute.xlu0 0
    %87 = vperm.xlu0 %86, %v83
    %v88 = vpop.permute.xlu0 %87
    %91 = vset.pattern.permute.xlu0 0
    %92 = vperm.xlu0 %91, %v84
    %v93 = vpop.permute.xlu0 %92
    %v95 = vmul.f32 %v81, %v88
    %v96 = vmul.f32 %v82, %v93
    %v97 = vld [vmem:[%s2] sm:$0x1]
    %v99 = vperm.slane %v97, 0
    %v101 = vmul.f32 %v95, %v99
    %v102 = vmul.f32 %v96, %v99
    %v103 = vpack.c.bf16 %v102, %v101
    %v104 = vld [vmem:[%s3] sm:$0xf]
    %v105 = vld [vmem:[%s3 + $0x4] sm:$0xf]
    %v106 = vld [vmem:[#allocation2] sm:$0xf]
    %v107 = vld [vmem:[#allocation2 + $0x4] sm:$0xf]
    %v108 = vld [vmem:[#allocation2 + $0x8] sm:$0xf]
    %v109 = vld [vmem:[#allocation2 + $0xc] sm:$0xf]
    %v110 = vld [vmem:[#allocation2 + $0x10] sm:$0xf]
    %v111 = vld [vmem:[#allocation2 + $0x14] sm:$0xf]
    %v112 = vld [vmem:[#allocation2 + $0x18] sm:$0xf]
    %v113 = vld [vmem:[#allocation2 + $0x1c] sm:$0xf]
    %v114 = vld [vmem:[#allocation2 + $0x20] sm:$0xf]
    %v115 = vld [vmem:[#allocation2 + $0x24] sm:$0xf]
    %v116 = vld [vmem:[#allocation2 + $0x28] sm:$0xf]
    %v117 = vld [vmem:[#allocation2 + $0x2c] sm:$0xf]
    %v118 = vld [vmem:[#allocation2 + $0x30] sm:$0xf]
    %v119 = vld [vmem:[#allocation2 + $0x34] sm:$0xf]
    %v120 = vld [vmem:[#allocation2 + $0x38] sm:$0xf]
    %v121 = vld [vmem:[#allocation2 + $0x3c] sm:$0xf]
    %v124 = vunpack.c.l.b16 %v104
    %v125 = vunpack.c.l.b16 %v105
    %v126 = vpack.c.b16 %v125, %v124
    %v144 = vunpack.c.l.b16 %v106
    %v145 = vunpack.c.l.b16 %v107
    %v146 = vunpack.c.l.b16 %v108
    %v147 = vunpack.c.l.b16 %v109
    %v148 = vunpack.c.l.b16 %v110
    %v149 = vunpack.c.l.b16 %v111
    %v150 = vunpack.c.l.b16 %v112
    %v151 = vunpack.c.l.b16 %v113
    %v152 = vunpack.c.l.b16 %v114
    %v153 = vunpack.c.l.b16 %v115
    %v154 = vunpack.c.l.b16 %v116
    %v155 = vunpack.c.l.b16 %v117
    %v156 = vunpack.c.l.b16 %v118
    %v157 = vunpack.c.l.b16 %v119
    %v158 = vunpack.c.l.b16 %v120
    %v159 = vunpack.c.l.b16 %v121
    %v160 = vpack.c.b16 %v145, %v144
    %v161 = vpack.c.b16 %v147, %v146
    %v162 = vpack.c.b16 %v149, %v148
    %v163 = vpack.c.b16 %v151, %v150
    %v164 = vpack.c.b16 %v153, %v152
    %v165 = vpack.c.b16 %v155, %v154
    %v166 = vpack.c.b16 %v157, %v156
    %v167 = vpack.c.b16 %v159, %v158
    %176 = vmatpush.bf16.msra.mxu0 %v167
    %177 = vmatpush.bf16.msra.mxu0 %v166
    %178 = vmatpush.bf16.msra.mxu0 %v165
    %179 = vmatpush.bf16.msra.mxu0 %v164
    %180 = vmatpush.bf16.msra.mxu0 %v163
    %181 = vmatpush.bf16.msra.mxu0 %v162
    %182 = vmatpush.bf16.msra.mxu0 %v161
    %183 = vmatpush.bf16.msra.mxu0 %v160
    %184 = vmatmul.bf16.gmra.mxu0 %v126
    %v185 = vpop.f32.mrf.mxu0
    %v186 = vadd.f32 0.0, %v185
    %v187 = vpop.f32.mrf.mxu0
    %v188 = vadd.f32 0.0, %v187
    %189 = vdwg.mxu0
    %v190 = vpack.c.bf16 %v188, %v186
    %vm191 = vcmask 130048
    %v193 = vsel %vm191, %v103, 0
    %195 = vmatpush.bf16.msra.mxu0 0
    %196 = vmatpush.bf16.msra.mxu0 0
    %197 = vmatpush.bf16.msra.mxu0 0
    %198 = vmatpush.bf16.msra.mxu0 0
    %199 = vmatpush.bf16.msra.mxu0 0
    %200 = vmatpush.bf16.msra.mxu0 0
    %201 = vmatpush.bf16.msra.mxu0 0
    %202 = vmatpush.bf16.msra.mxu0 %v190
    %203 = vmatmul.bf16.gmra.mxu0 %v193
    %v204 = vpop.f32.mrf.mxu0
    %v205 = vadd.f32 0.0, %v204
    %v206 = vpop.f32.mrf.mxu0
    %v207 = vadd.f32 0.0, %v206
    %208 = vdwg.mxu0
    %v209 = vadd.f32 %v205, %v207
    %v210 = vrot.slane %v209, 4
    %v211 = vadd.f32 %v209, %v210
    %v212 = vrot.slane %v211, 2
    %v213 = vadd.f32 %v211, %v212
    %v214 = vrot.slane %v213, 1
    %v215 = vadd.f32 %v213, %v214
    %v216 = vmul.f32 %v215, 0.0625
    %v217 = vmul.f32 %v205, %v205
    %v218 = vmul.f32 %v207, %v207
    %v219 = vadd.f32 %v217, %v218
    %v220 = vrot.slane %v219, 4
    %v221 = vadd.f32 %v219, %v220
    %v222 = vrot.slane %v221, 2
    %v223 = vadd.f32 %v221, %v222
    %v224 = vrot.slane %v223, 1
    %v225 = vadd.f32 %v223, %v224
    %v226 = vmul.f32 %v225, 0.0625
    %v227 = vmul.f32 %v216, %v216
    %v228 = vsub.f32 %v226, %v227
    %v229 = vld [vmem:[%s5] sm:$0x1]
    %v230 = vadd.f32 %v228, 1e-05
    %v231 = vrsqrt.pop %v230
    %v232 = vmul.f32 %v231, %v230
    %v233 = vmul.f32 %v232, %v231
    %v234 = vmul.f32 0.5, %v233
    %v235 = vsub.f32 1.5, %v234
    %v236 = vmul.f32 %v231, %v235
    %vm237 = vweird.f32 %v230
    %vm238 = vweird.f32 %v231
    %vm239 = vmor %vm237, %vm238
    %v240 = vsel %vm239, %v231, %v236
    %v241 = vmul.f32 %v229, %v240
    %v242 = vld [vmem:[%s6] sm:$0x1]
    %v243 = vmul.f32 %v216, %v241
    %v244 = vsub.f32 %v242, %v243
    %v246 = vperm.slane %v241, 0
    %v248 = vmul.f32 %v205, %v246
    %v249 = vmul.f32 %v207, %v246
    %v251 = vperm.slane %v244, 0
    %v253 = vadd.f32 %v248, %v251
    %v254 = vadd.f32 %v249, %v251
    %v255 = vmax.f32 %v253, 0.0
    %v256 = vmax.f32 %v254, 0.0
    %v257 = vpack.c.bf16 %v256, %v255
    %v258 = vld [vmem:[#allocation5] sm:$0xf]
    %v259 = vld [vmem:[#allocation5 + $0x4] sm:$0xf]
    %v260 = vld [vmem:[#allocation5 + $0x8] sm:$0xf]
    %v261 = vld [vmem:[#allocation5 + $0xc] sm:$0xf]
    %v262 = vld [vmem:[#allocation5 + $0x10] sm:$0xf]
    %v263 = vld [vmem:[#allocation5 + $0x14] sm:$0xf]
    %v264 = vld [vmem:[#allocation5 + $0x18] sm:$0xf]
    %v265 = vld [vmem:[#allocation5 + $0x1c] sm:$0xf]
    %v266 = vld [vmem:[#allocation5 + $0x20] sm:$0xf]
    %v267 = vld [vmem:[#allocation5 + $0x24] sm:$0xf]
    %v268 = vld [vmem:[#allocation5 + $0x28] sm:$0xf]
    %v269 = vld [vmem:[#allocation5 + $0x2c] sm:$0xf]
    %v270 = vld [vmem:[#allocation5 + $0x30] sm:$0xf]
    %v271 = vld [vmem:[#allocation5 + $0x34] sm:$0xf]
    %v272 = vld [vmem:[#allocation5 + $0x38] sm:$0xf]
    %v273 = vld [vmem:[#allocation5 + $0x3c] sm:$0xf]
    %v290 = vunpack.c.l.b16 %v258
    %v291 = vunpack.c.l.b16 %v259
    %v292 = vunpack.c.l.b16 %v260
    %v293 = vunpack.c.l.b16 %v261
    %v294 = vunpack.c.l.b16 %v262
    %v295 = vunpack.c.l.b16 %v263
    %v296 = vunpack.c.l.b16 %v264
    %v297 = vunpack.c.l.b16 %v265
    %v298 = vunpack.c.l.b16 %v266
    %v299 = vunpack.c.l.b16 %v267
    %v300 = vunpack.c.l.b16 %v268
    %v301 = vunpack.c.l.b16 %v269
    %v302 = vunpack.c.l.b16 %v270
    %v303 = vunpack.c.l.b16 %v271
    %v304 = vunpack.c.l.b16 %v272
    %v305 = vunpack.c.l.b16 %v273
    %v306 = vpack.c.b16 %v291, %v290
    %v307 = vpack.c.b16 %v293, %v292
    %v308 = vpack.c.b16 %v295, %v294
    %v309 = vpack.c.b16 %v297, %v296
    %v310 = vpack.c.b16 %v299, %v298
    %v311 = vpack.c.b16 %v301, %v300
    %v312 = vpack.c.b16 %v303, %v302
    %v313 = vpack.c.b16 %v305, %v304
    %322 = vmatpush.bf16.msra.mxu0 %v313
    %323 = vmatpush.bf16.msra.mxu0 %v312
    %324 = vmatpush.bf16.msra.mxu0 %v311
    %325 = vmatpush.bf16.msra.mxu0 %v310
    %326 = vmatpush.bf16.msra.mxu0 %v309
    %327 = vmatpush.bf16.msra.mxu0 %v308
    %328 = vmatpush.bf16.msra.mxu0 %v307
    %329 = vmatpush.bf16.msra.mxu0 %v306
    %330 = vmatmul.bf16.gmra.mxu0 %v257
    %v331 = vpop.f32.mrf.mxu0
    %v332 = vadd.f32 0.0, %v331
    %v333 = vpop.f32.mrf.mxu0
    %v334 = vadd.f32 0.0, %v333
    %335 = vdwg.mxu0
    %v336 = vpack.c.bf16 %v334, %v332
    %v337 = vld [vmem:[%s8] sm:$0x1]
    %v339 = vperm.slane %v337, 0
    %341 = vmatpush.bf16.msra.mxu0 0
    %342 = vmatpush.bf16.msra.mxu0 0
    %343 = vmatpush.bf16.msra.mxu0 0
    %344 = vmatpush.bf16.msra.mxu0 0
    %345 = vmatpush.bf16.msra.mxu0 0
    %346 = vmatpush.bf16.msra.mxu0 0
    %347 = vmatpush.bf16.msra.mxu0 0
    %348 = vmatpush.bf16.msra.mxu0 %v336
    %349 = vmatmul.bf16.gmra.mxu0 %v193
    %v350 = vpop.f32.mrf.mxu0
    %v351 = vadd.f32 %v339, %v350
    %v352 = vpop.f32.mrf.mxu0
    %v353 = vadd.f32 %v339, %v352
    %354 = vdwg.mxu0
    %v355 = vtanh.pop %v351
    %v356 = vtanh.pop %v353
    %357 = vst [vmem:[#allocation7] sm:$0xff] %v355
    %358 = vst [vmem:[#allocation7 + $0x8] sm:$0xff] %v356
    // Predicated region
    $region46: #{tpu_custom_call.1} parent=1 // pred_check
      _
    $region47: #{tpu_custom_call.1} parent=1 // pred_check_branch
      %360 = sbr.rel (0) target = $region49
    $region48: #{tpu_custom_call.1} parent=1 // pred_region
      %362 = vsyncadd [#allocation4], 0
      %s363 = sshll.u32 [#allocation7], 4
      %s364 = int_to_ptr.vmem [resolvable:$true] %s363
      %s365 = sshll.u32 %s9, 4
      %s366 = int_to_ptr.hbm [resolvable:$true] %s365
      %371 = dma.vmem_to_hbm [thread:$0]  %s364, 256, %s366, [#allocation4], 128, 128, 8
    $region49: #{tpu_custom_call.1} parent=1 // pred_fallthru
      _
    // Predicated region
    $region50: #{tpu_custom_call.1} parent=1 // pred_check
      _
    $region51: #{tpu_custom_call.1} parent=1 // pred_check_branch
      %373 = sbr.rel (0) target = $region53
    $region52: #{tpu_custom_call.1} parent=1 // pred_region
      %375 = dma.done [#allocation4], 256
    $region53: #{tpu_custom_call.1} parent=1 // pred_fallthru
      _
    %376 = vsyncpa [#allocation3], 1
    %377 = vsyncpa [#allocation6], 1
    %378 = vsyncpa [#allocation4], 1

</llo_original>
